<compile_context>
chip_gen: v6e
topology: v6e:2x2x1
jax: 0.10.0
libtpu: 0.0.40
codegen_flags: <defaults>
</compile_context>

<pallas_src>
import jax
import jax.numpy as jnp
from jax.experimental import pallas as pl
from jax.experimental.pallas import tpu as pltpu

CONV_K = 10
L_IN = 99
L_CONV = L_IN - CONV_K + 1      # 90
POOL = 3
L_POOL = L_CONV // POOL         # 30 == LSTM input_size
HID = 64
GATE_W = 3 * 2 * HID            # 384: [i_f|i_r|g_f|g_r|o_f|o_r] (forget gate dropped)
CONV_IN = 4 * L_IN              # 396 = free NLC row-major flatten of (99, 4)
OUT_PAD = 128                   # lane-dense padded classifier output width


def baseline_kernel(x_ref, wpool_ref, convb_ref, wih_ref, gbias_ref,
                    wcls_ref, clsb_ref, o_ref):
    x = x_ref[...]                                                # (TB, 396)

    # ---- Conv1d(4->1,k=10) + bias: one banded im2col matmul; pool selectors
    # are pre-folded into wpool, so columns are [off0(30)|off1(30)|off2(30)].
    conv = (jnp.dot(x, wpool_ref[...], preferred_element_type=jnp.float32)
            + convb_ref[0, 0])                                    # (TB, 90)
    r = jnp.maximum(conv, 0.0)                                    # ReLU

    # ---- MaxPool1d(3): lane-wise max of the three offset slices (exact) -----
    pooled = jnp.maximum(jnp.maximum(r[:, 0:L_POOL], r[:, L_POOL:2 * L_POOL]),
                         r[:, 2 * L_POOL:3 * L_POOL])             # (TB, 30)

    # ---- BiLSTM, seq_len = 1, h0 = c0 = 0 -----------------------------------
    # gates = pooled @ W_ih^T + (b_ih + b_hh); W_hh terms and the forget gate
    # are dropped at pack time (exact).  Interleaved layout gives 128-lane
    # aligned slices and h == [h_f | h_r] directly.
    gates = (jnp.dot(pooled, wih_ref[...], preferred_element_type=jnp.float32)
             + gbias_ref[...])                                    # (TB, 384)
    i = jax.nn.sigmoid(gates[:, 0:2 * HID])                       # (TB, 128)
    g = jnp.tanh(gates[:, 2 * HID:4 * HID])                       # (TB, 128)
    o = jax.nn.sigmoid(gates[:, 4 * HID:6 * HID])                 # (TB, 128)
    h = o * jnp.tanh(i * g)                                       # (TB, 128) = [h_f | h_r]

    # ---- Linear(128->2) + Sigmoid: single (128,128) matmul, lane-dense out ---
    logits = (jnp.dot(h, wcls_ref[...], preferred_element_type=jnp.float32)
              + clsb_ref[...])                                    # (TB, 128); cols >= 2 unused
    o_ref[...] = jax.nn.sigmoid(logits)


def _round_up(n, m):
    return ((n + m - 1) // m) * m


def baseline_forward_batched(x_nlc, kernel_params, *, tb=None):
    """Fused Conv/Pool/BiLSTM/Linear for every batch row. x_nlc: (B, 99, 4) -> (B, 2)."""
    wpool, convb, wih, gbias, wcls, clsb = kernel_params
    B = x_nlc.shape[0]
    # FREE NLC row-major flatten (index l*4 + c) — matches wpool's row layout,
    # so no NCL transpose and no ones-column concat (bias is an SMEM scalar).
    x_flat = x_nlc.astype(jnp.float32).reshape(B, CONV_IN)

    if tb is None:
        # Batch tile: multiple of 8 sublanes, cap 512; prefer grid length >= 2
        # so both TensorCores (v7x megacore) get work on the batched path.
        tb = 8 if B <= 8 else min(512, _round_up((B + 1) // 2, 8))
    bp = _round_up(B, tb)
    if bp != B:
        x_flat = jnp.pad(x_flat, ((0, bp - B), (0, 0)))

    out = pl.pallas_call(
        baseline_kernel,
        out_shape=jax.ShapeDtypeStruct((bp, OUT_PAD), jnp.float32),
        grid=(bp // tb,),
        in_specs=[
            pl.BlockSpec((tb, CONV_IN), lambda b: (b, 0)),        # x tile (per batch tile)
            pl.BlockSpec((CONV_IN, L_CONV), lambda b: (0, 0)),    # pool-folded conv weight (396, 90)
            pl.BlockSpec(memory_space=pltpu.MemorySpace.SMEM),    # conv bias scalar (1, 1)
            pl.BlockSpec((L_POOL, GATE_W), lambda b: (0, 0)),     # W_ih interleaved, forget-free (30, 384)
            pl.BlockSpec((1, GATE_W), lambda b: (0, 0)),          # gate bias (1, 384)
            pl.BlockSpec((2 * HID, OUT_PAD), lambda b: (0, 0)),   # classifier weight (128, 128)
            pl.BlockSpec((1, OUT_PAD), lambda b: (0, 0)),         # classifier bias (1, 128)
        ],
        out_specs=pl.BlockSpec((tb, OUT_PAD), lambda b: (b, 0)),
        compiler_params=pltpu.CompilerParams(
            dimension_semantics=("parallel",)),                   # batch rows are independent
    )(x_flat, wpool, convb, wih, gbias, wcls, clsb)
    return out[:B, :2]


def baseline_forward(x_nlc, kernel_params):
    """Matches the PyTorch module: forward(inputs) returns x[0] -> (1, 2).

    Only batch row 0 contributes to the returned value, so only that row is
    computed (free (B-1)/B work reduction vs. running the whole batch).
    """
    return baseline_forward_batched(x_nlc[0:1], kernel_params)


def init_params(key):
    """Deterministic synthetic parameters in PyTorch layouts + packed kernel layouts."""
    ks = jax.random.split(key, 12)

    def u(k, shape, fan_in):
        bound = 1.0 / jnp.sqrt(jnp.float32(fan_in))
        return jax.random.uniform(k, shape, jnp.float32, -bound, bound)

    conv_w = u(ks[0], (1, 4, CONV_K), 4 * CONV_K)        # Conv1d (out, in, k)
    conv_b = u(ks[1], (1,), 4 * CONV_K)
    w_ih_f = u(ks[2], (4 * HID, L_POOL), HID)            # LSTM weight_ih_l0 (i,f,g,o)
    _w_hh_f = u(ks[3], (4 * HID, HID), HID)              # unused: h0 = 0, seq_len = 1
    b_ih_f = u(ks[4], (4 * HID,), HID)
    b_hh_f = u(ks[5], (4 * HID,), HID)
    w_ih_r = u(ks[6], (4 * HID, L_POOL), HID)            # *_reverse
    _w_hh_r = u(ks[7], (4 * HID, HID), HID)              # unused (recurrence is zero)
    b_ih_r = u(ks[8], (4 * HID,), HID)
    b_hh_r = u(ks[9], (4 * HID,), HID)
    cls_w = u(ks[10], (2, 2 * HID), 2 * HID)             # Linear (out, in) over [h_f|h_r]
    cls_b = u(ks[11], (2,), 2 * HID)

    # --- pack into kernel layouts (plain-JAX glue, done once) ---------------
    # Banded im2col conv weight over the NLC-flattened row (index l*4 + c).
    wband = jnp.zeros((CONV_IN, L_CONV), jnp.float32)
    t = jnp.arange(L_CONV)
    for c in range(4):
        for k in range(CONV_K):
            wband = wband.at[(t + k) * 4 + c, t].set(conv_w[0, c, k])
    # Fold the stride-3 max-pool selectors: reorder columns [off0 | off1 | off2].
    perm = jnp.concatenate([jnp.arange(L_POOL) * POOL + off for off in range(POOL)])
    wpool = wband[:, perm]                               # (396, 90)
    convb = conv_b.reshape(1, 1)                         # SMEM scalar conv bias

    # Interleaved, forget-free gate weights/bias: [i_f|i_r|g_f|g_r|o_f|o_r].
    def gcol(w, gate):                                   # (30, 64) slice of a direction
        return w[gate * HID:(gate + 1) * HID, :].T
    wih = jnp.concatenate([gcol(w_ih_f, 0), gcol(w_ih_r, 0),
                           gcol(w_ih_f, 2), gcol(w_ih_r, 2),
                           gcol(w_ih_f, 3), gcol(w_ih_r, 3)], axis=1)   # (30, 384)
    bf = b_ih_f + b_hh_f
    br = b_ih_r + b_hh_r
    gbias = jnp.concatenate([bf[0:HID], br[0:HID],
                             bf[2 * HID:3 * HID], br[2 * HID:3 * HID],
                             bf[3 * HID:4 * HID], br[3 * HID:4 * HID]])[None, :]  # (1, 384)

    # Single (128,128) classifier matmul over h = [h_f|h_r]; lane-dense padded.
    wcls = jnp.zeros((2 * HID, OUT_PAD), jnp.float32).at[:, :2].set(cls_w.T)
    clsb = jnp.zeros((1, OUT_PAD), jnp.float32).at[0, :2].set(cls_b)

    kernel_params = (wpool, convb, wih, gbias, wcls, clsb)
    raw_params = (conv_w, conv_b, w_ih_f, b_ih_f, b_hh_f,
                  w_ih_r, b_ih_r, b_hh_r, cls_w, cls_b)
    return kernel_params, raw_params


def reference_forward_all(x_nlc, raw):
    """Pure-JAX reference mirroring the PyTorch forward, for all rows -> (B, 2)."""
    (conv_w, conv_b, w_ih_f, b_ih_f, b_hh_f,
     w_ih_r, b_ih_r, b_hh_r, cls_w, cls_b) = raw
    x = jnp.transpose(x_nlc, (0, 2, 1))                  # (B, 4, 99)
    taps = [jnp.einsum("bck,ck->b", x[:, :, t:t + CONV_K], conv_w[0])
            for t in range(L_CONV)]
    conv = jnp.stack(taps, axis=1) + conv_b[0]           # (B, 90)
    r = jnp.maximum(conv, 0.0)
    pooled = jnp.max(r.reshape(-1, L_POOL, POOL), axis=2)  # (B, 30)

    def lstm_dir(w_ih, b_ih, b_hh):                      # seq_len=1, h0=c0=0 (exact)
        g = pooled @ w_ih.T + b_ih + b_hh
        i = jax.nn.sigmoid(g[:, :HID])
        gg = jnp.tanh(g[:, 2 * HID:3 * HID])
        o = jax.nn.sigmoid(g[:, 3 * HID:])
        return o * jnp.tanh(i * gg)

    h = jnp.concatenate([lstm_dir(w_ih_f, b_ih_f, b_hh_f),
                         lstm_dir(w_ih_r, b_ih_r, b_hh_r)], axis=1)      # (B, 128)
    return jax.nn.sigmoid(h @ cls_w.T + cls_b)           # (B, 2)


if __name__ == "__main__":
    key = jax.random.PRNGKey(0)
    kx, kp = jax.random.split(key)
    B = 16
    x = jax.random.normal(kx, (B, L_IN, 4), jnp.float32)   # (batch, seq=99, feat=4)

    kernel_params, raw_params = init_params(kp)

    # Module-semantics forward (returns x[0] like the PyTorch module).
    out = jax.block_until_ready(baseline_forward(x, kernel_params))
    assert out.shape == (1, 2), out.shape
    ref = reference_forward_all(x, raw_params)[0:1]
    if not bool(jnp.allclose(out, ref, atol=1e-4, rtol=1e-4)):
        raise AssertionError(f"kernel/reference mismatch (x[0] path):\n{out}\nvs\n{ref}")

    # Batch-tiled path over all rows — validates the (TB, .) tiling + grid=2.
    out_all = jax.block_until_ready(baseline_forward_batched(x, kernel_params))
    ref_all = reference_forward_all(x, raw_params)
    if not bool(jnp.allclose(out_all, ref_all, atol=1e-4, rtol=1e-4)):
        raise AssertionError("kernel/reference mismatch (batched path)")

    print("KERNEL_OK")
</pallas_src>

<mosaic_0001>
module attributes {stable_mosaic.version = 11 : i64} {
  func.func @baseline_kernel(%arg0: i32, %arg1: memref<8x396xf32, #tpu.memory_space<vmem>>, %arg2: memref<396x90xf32, #tpu.memory_space<vmem>>, %arg3: memref<1x1xf32, #tpu.memory_space<smem>>, %arg4: memref<30x384xf32, #tpu.memory_space<vmem>>, %arg5: memref<1x384xf32, #tpu.memory_space<vmem>>, %arg6: memref<128x128xf32, #tpu.memory_space<vmem>>, %arg7: memref<1x128xf32, #tpu.memory_space<vmem>>, %arg8: memref<8x128xf32, #tpu.memory_space<vmem>>) attributes {dimension_semantics = [#tpu.dimension_semantics<parallel>], iteration_bounds = array<i64: 1>, scalar_prefetch = 0 : i64, scratch_operands = 0 : i64, tpu.core_type = #tpu.core_type<tc>, window_params = [{transform_indices = @transform_0, window_bounds = array<i64: 8, 396>}, {pipeline_mode = #tpu.pipeline_mode<synchronous>, transform_indices = @transform_1, window_bounds = array<i64: 396, 90>}, {transform_indices = @transform_2, window_bounds = array<i64: 1, 1>}, {pipeline_mode = #tpu.pipeline_mode<synchronous>, transform_indices = @transform_3, window_bounds = array<i64: 30, 384>}, {pipeline_mode = #tpu.pipeline_mode<synchronous>, transform_indices = @transform_4, window_bounds = array<i64: 1, 384>}, {pipeline_mode = #tpu.pipeline_mode<synchronous>, transform_indices = @transform_5, window_bounds = array<i64: 128, 128>}, {pipeline_mode = #tpu.pipeline_mode<synchronous>, transform_indices = @transform_6, window_bounds = array<i64: 1, 128>}, {transform_indices = @transform_7, window_bounds = array<i64: 8, 128>}]} {
    %c0 = arith.constant 0 : index
    %c0_0 = arith.constant 0 : index
    %0 = vector.load %arg1[%c0, %c0_0] : memref<8x396xf32, #tpu.memory_space<vmem>>, vector<8x396xf32>
    %c0_1 = arith.constant 0 : index
    %c0_2 = arith.constant 0 : index
    %1 = vector.load %arg2[%c0_1, %c0_2] : memref<396x90xf32, #tpu.memory_space<vmem>>, vector<396x90xf32>
    %cst = arith.constant dense<0.000000e+00> : vector<8x90xf32>
    %2 = tpu.matmul %0, %1, %cst {dimension_numbers = #tpu.dot_dimension_numbers<[1], [0], [0], [1], [0, 0, 1, 1], [], []>} : vector<8x396xf32>, vector<396x90xf32>, vector<8x90xf32> -> vector<8x90xf32>
    %c0_3 = arith.constant 0 : index
    %c0_4 = arith.constant 0 : index
    %3 = memref.load %arg3[%c0_3, %c0_4] : memref<1x1xf32, #tpu.memory_space<smem>>
    %4 = vector.broadcast %3 : f32 to vector<8x90xf32>
    %5 = arith.addf %2, %4 : vector<8x90xf32>
    %cst_5 = arith.constant 0.000000e+00 : f32
    %6 = vector.broadcast %cst_5 : f32 to vector<8x90xf32>
    %7 = arith.maximumf %5, %6 : vector<8x90xf32>
    %8 = vector.extract_strided_slice %7 {offsets = [0, 0], sizes = [8, 30], strides = [1, 1]} : vector<8x90xf32> to vector<8x30xf32>
    %9 = vector.extract_strided_slice %7 {offsets = [0, 30], sizes = [8, 30], strides = [1, 1]} : vector<8x90xf32> to vector<8x30xf32>
    %10 = arith.maximumf %8, %9 : vector<8x30xf32>
    %11 = vector.extract_strided_slice %7 {offsets = [0, 60], sizes = [8, 30], strides = [1, 1]} : vector<8x90xf32> to vector<8x30xf32>
    %12 = arith.maximumf %10, %11 : vector<8x30xf32>
    %c0_6 = arith.constant 0 : index
    %c0_7 = arith.constant 0 : index
    %13 = vector.load %arg4[%c0_6, %c0_7] : memref<30x384xf32, #tpu.memory_space<vmem>>, vector<30x384xf32>
    %cst_8 = arith.constant dense<0.000000e+00> : vector<8x384xf32>
    %14 = tpu.matmul %12, %13, %cst_8 {dimension_numbers = #tpu.dot_dimension_numbers<[1], [0], [0], [1], [0, 0, 1, 1], [], []>} : vector<8x30xf32>, vector<30x384xf32>, vector<8x384xf32> -> vector<8x384xf32>
    %c0_9 = arith.constant 0 : index
    %c0_10 = arith.constant 0 : index
    %15 = vector.load %arg5[%c0_9, %c0_10] : memref<1x384xf32, #tpu.memory_space<vmem>>, vector<1x384xf32>
    %16 = vector.broadcast %15 : vector<1x384xf32> to vector<8x384xf32>
    %17 = arith.addf %14, %16 : vector<8x384xf32>
    %18 = vector.extract_strided_slice %17 {offsets = [0, 0], sizes = [8, 128], strides = [1, 1]} : vector<8x384xf32> to vector<8x128xf32>
    %19 = arith.negf %18 : vector<8x128xf32>
    %20 = math.exp %19 : vector<8x128xf32>
    %cst_11 = arith.constant 1.000000e+00 : f32
    %21 = vector.broadcast %cst_11 : f32 to vector<8x128xf32>
    %22 = arith.addf %21, %20 : vector<8x128xf32>
    %23 = arith.divf %21, %22 : vector<8x128xf32>
    %24 = vector.extract_strided_slice %17 {offsets = [0, 128], sizes = [8, 128], strides = [1, 1]} : vector<8x384xf32> to vector<8x128xf32>
    %25 = math.tanh %24 : vector<8x128xf32>
    %26 = vector.extract_strided_slice %17 {offsets = [0, 256], sizes = [8, 128], strides = [1, 1]} : vector<8x384xf32> to vector<8x128xf32>
    %27 = arith.negf %26 : vector<8x128xf32>
    %28 = math.exp %27 : vector<8x128xf32>
    %cst_12 = arith.constant 1.000000e+00 : f32
    %29 = vector.broadcast %cst_12 : f32 to vector<8x128xf32>
    %30 = arith.addf %29, %28 : vector<8x128xf32>
    %31 = arith.divf %29, %30 : vector<8x128xf32>
    %32 = arith.mulf %23, %25 : vector<8x128xf32>
    %33 = math.tanh %32 : vector<8x128xf32>
    %34 = arith.mulf %31, %33 : vector<8x128xf32>
    %c0_13 = arith.constant 0 : index
    %c0_14 = arith.constant 0 : index
    %35 = vector.load %arg6[%c0_13, %c0_14] : memref<128x128xf32, #tpu.memory_space<vmem>>, vector<128x128xf32>
    %cst_15 = arith.constant dense<0.000000e+00> : vector<8x128xf32>
    %36 = tpu.matmul %34, %35, %cst_15 {dimension_numbers = #tpu.dot_dimension_numbers<[1], [0], [0], [1], [0, 0, 1, 1], [], []>} : vector<8x128xf32>, vector<128x128xf32>, vector<8x128xf32> -> vector<8x128xf32>
    %c0_16 = arith.constant 0 : index
    %c0_17 = arith.constant 0 : index
    %37 = vector.load %arg7[%c0_16, %c0_17] : memref<1x128xf32, #tpu.memory_space<vmem>>, vector<1x128xf32>
    %38 = vector.broadcast %37 : vector<1x128xf32> to vector<8x128xf32>
    %39 = arith.addf %36, %38 : vector<8x128xf32>
    %40 = arith.negf %39 : vector<8x128xf32>
    %41 = math.exp %40 : vector<8x128xf32>
    %cst_18 = arith.constant 1.000000e+00 : f32
    %42 = vector.broadcast %cst_18 : f32 to vector<8x128xf32>
    %43 = arith.addf %42, %41 : vector<8x128xf32>
    %44 = arith.divf %42, %43 : vector<8x128xf32>
    %c0_19 = arith.constant 0 : index
    %c0_20 = arith.constant 0 : index
    %45 = vector.load %arg8[%c0_19, %c0_20] : memref<8x128xf32, #tpu.memory_space<vmem>>, vector<8x128xf32>
    tpu.vector_store %arg8[%c0_19, %c0_20], %44 {strides = array<i32>} : memref<8x128xf32, #tpu.memory_space<vmem>>, vector<8x128xf32>,
    return
  }
  func.func @transform_0(%arg0: i32) -> (i32, i32) {
    %c0_i32 = arith.constant 0 : i32
    %c0_i32_0 = arith.constant 0 : i32
    return %arg0, %c0_i32 : i32, i32
  }
  func.func @transform_1(%arg0: i32) -> (i32, i32) {
    %c0_i32 = arith.constant 0 : i32
    %c0_i32_0 = arith.constant 0 : i32
    %c0_i32_1 = arith.constant 0 : i32
    return %c0_i32, %c0_i32_0 : i32, i32
  }
  func.func @transform_2(%arg0: i32) -> (i32, i32) {
    %c0_i32 = arith.constant 0 : i32
    %c0_i32_0 = arith.constant 0 : i32
    %c0_i32_1 = arith.constant 0 : i32
    return %c0_i32, %c0_i32_0 : i32, i32
  }
  func.func @transform_3(%arg0: i32) -> (i32, i32) {
    %c0_i32 = arith.constant 0 : i32
    %c0_i32_0 = arith.constant 0 : i32
    %c0_i32_1 = arith.constant 0 : i32
    return %c0_i32, %c0_i32_0 : i32, i32
  }
  func.func @transform_4(%arg0: i32) -> (i32, i32) {
    %c0_i32 = arith.constant 0 : i32
    %c0_i32_0 = arith.constant 0 : i32
    %c0_i32_1 = arith.constant 0 : i32
    return %c0_i32, %c0_i32_0 : i32, i32
  }
  func.func @transform_5(%arg0: i32) -> (i32, i32) {
    %c0_i32 = arith.constant 0 : i32
    %c0_i32_0 = arith.constant 0 : i32
    %c0_i32_1 = arith.constant 0 : i32
    return %c0_i32, %c0_i32_0 : i32, i32
  }
  func.func @transform_6(%arg0: i32) -> (i32, i32) {
    %c0_i32 = arith.constant 0 : i32
    %c0_i32_0 = arith.constant 0 : i32
    %c0_i32_1 = arith.constant 0 : i32
    return %c0_i32, %c0_i32_0 : i32, i32
  }
  func.func @transform_7(%arg0: i32) -> (i32, i32) {
    %c0_i32 = arith.constant 0 : i32
    %c0_i32_0 = arith.constant 0 : i32
    return %arg0, %c0_i32 : i32, i32
  }
}

</mosaic_0001>

<llo_original>
// kernel: tpu_custom_call.1
$region0: #{tpu_custom_call.1}
  #allocation0 [shape = 'u32[]', space=smem, size = 0x4, offset = 0x4, fixed_abs, tag = 'smem constant byte address 0x4 - core index']
  #allocation1 [shape = 'u32[144,128]{1,0:T(1,128)}', space=vmem, size = 0x12000, scoped, tag = 'internal scratch']
  #allocation2 [shape = 'f32[1,1]{1,0:T(1,128)S(6)}', space=smem, size = 0x200, scoped, tag = 'scoped memory for tpu_custom_call.1']
  %s0 = inlined_call_operand.vmem [shape: f32[8,396], index: 0, kind: input, shape index: {}]
  %s1 = inlined_call_operand.vmem [shape: f32[396,90], index: 1, kind: input, shape index: {}]
  %s2 = inlined_call_operand.<no memory space> [shape: f32[1,1], index: 2, kind: input, shape index: {}]
  %s3 = inlined_call_operand.vmem [shape: f32[30,384], index: 3, kind: input, shape index: {}]
  %s4 = inlined_call_operand.vmem [shape: f32[1,384], index: 4, kind: input, shape index: {}]
  %s5 = inlined_call_operand.vmem [shape: f32[128,128], index: 5, kind: input, shape index: {}]
  %s6 = inlined_call_operand.vmem [shape: f32[1,128], index: 6, kind: input, shape index: {}]
  %s7 = inlined_call_operand.hbm [shape: f32[8,128], index: 7, kind: output, shape index: {}]
  %s8 = sld [smem:[#allocation0]]
  $region38: #{tpu_custom_call.1} parent=0
    _
  %s10 = ssub.s32 1, %s8
  %s11 = scalar_select 0, %s10, %s8
  %12 = sst [smem:[#allocation2]] %s2
  $region1: #{tpu_custom_call.1} parent=0
    #allocation3 [shape = 'u8[4096]{0}', space=vmem, size = 0x1000, scoped, tag = 'output window, operand 0, single buffered']
    #allocation4 [shape = 's32[1]{0}', space=sflag, size = 0x4, scoped, tag = 'scoped memory for tpu_custom_call.1']
    %13 = vsyncpa [#allocation4], 0
    // Predicated region
    $region2: #{tpu_custom_call.1} parent=1 // pred_check
      _
    $region3: #{tpu_custom_call.1} parent=1 // pred_check_branch
      %15 = sbr.rel (0) target = $region5
    $region4: #{tpu_custom_call.1} parent=1 // pred_region
      _
    $region5: #{tpu_custom_call.1} parent=1 // pred_fallthru
      _
    // Predicated region
    $region6: #{tpu_custom_call.1} parent=1 // pred_check
      _
    $region7: #{tpu_custom_call.1} parent=1 // pred_check_branch
      %17 = sbr.rel (0) target = $region9
    $region8: #{tpu_custom_call.1} parent=1 // pred_region
      _
    $region9: #{tpu_custom_call.1} parent=1 // pred_fallthru
      _
    // Predicated region
    $region10: #{tpu_custom_call.1} parent=1 // pred_check
      _
    $region11: #{tpu_custom_call.1} parent=1 // pred_check_branch
      %19 = sbr.rel (0) target = $region13
    $region12: #{tpu_custom_call.1} parent=1 // pred_region
      _
    $region13: #{tpu_custom_call.1} parent=1 // pred_fallthru
      _
    // Predicated region
    $region14: #{tpu_custom_call.1} parent=1 // pred_check
      _
    $region15: #{tpu_custom_call.1} parent=1 // pred_check_branch
      %21 = sbr.rel (0) target = $region17
    $region16: #{tpu_custom_call.1} parent=1 // pred_region
      _
    $region17: #{tpu_custom_call.1} parent=1 // pred_fallthru
      _
    // Predicated region
    $region18: #{tpu_custom_call.1} parent=1 // pred_check
      _
    $region19: #{tpu_custom_call.1} parent=1 // pred_check_branch
      %23 = sbr.rel (0) target = $region21
    $region20: #{tpu_custom_call.1} parent=1 // pred_region
      _
    $region21: #{tpu_custom_call.1} parent=1 // pred_fallthru
      _
    // Predicated region
    $region22: #{tpu_custom_call.1} parent=1 // pred_check
      _
    $region23: #{tpu_custom_call.1} parent=1 // pred_check_branch
      %25 = sbr.rel (0) target = $region25
    $region24: #{tpu_custom_call.1} parent=1 // pred_region
      _
    $region25: #{tpu_custom_call.1} parent=1 // pred_fallthru
      _
    // Predicated region
    $region26: #{tpu_custom_call.1} parent=1 // pred_check
      _
    $region27: #{tpu_custom_call.1} parent=1 // pred_check_branch
      %27 = sbr.rel (0) target = $region29
    $region28: #{tpu_custom_call.1} parent=1 // pred_region
      _
    $region29: #{tpu_custom_call.1} parent=1 // pred_fallthru
      _
    %v28 = vld [vmem:[%s0] sm:$0xff]
    %v29 = vld [vmem:[%s0 + $0x8] sm:$0xff]
    %v30 = vld [vmem:[%s0 + $0x10] sm:$0xff]
    %v31 = vld [vmem:[%s0 + $0x18] sm:$0xff]
    %v32 = vld [vmem:[%s1] sm:$0xff]
    %v33 = vld [vmem:[%s1 + $0x8] sm:$0xff]
    %v34 = vld [vmem:[%s1 + $0x10] sm:$0xff]
    %v35 = vld [vmem:[%s1 + $0x18] sm:$0xff]
    %v36 = vld [vmem:[%s1 + $0x20] sm:$0xff]
    %v37 = vld [vmem:[%s1 + $0x28] sm:$0xff]
    %v38 = vld [vmem:[%s1 + $0x30] sm:$0xff]
    %v39 = vld [vmem:[%s1 + $0x38] sm:$0xff]
    %v40 = vld [vmem:[%s1 + $0x40] sm:$0xff]
    %v41 = vld [vmem:[%s1 + $0x48] sm:$0xff]
    %v42 = vld [vmem:[%s1 + $0x50] sm:$0xff]
    %v43 = vld [vmem:[%s1 + $0x58] sm:$0xff]
    %v44 = vld [vmem:[%s1 + $0x60] sm:$0xff]
    %v45 = vld [vmem:[%s1 + $0x68] sm:$0xff]
    %v46 = vld [vmem:[%s1 + $0x70] sm:$0xff]
    %v47 = vld [vmem:[%s1 + $0x78] sm:$0xff]
    %v48 = vld [vmem:[%s1 + $0x80] sm:$0xff]
    %v49 = vld [vmem:[%s1 + $0x88] sm:$0xff]
    %v50 = vld [vmem:[%s1 + $0x90] sm:$0xff]
    %v51 = vld [vmem:[%s1 + $0x98] sm:$0xff]
    %v52 = vld [vmem:[%s1 + $0xa0] sm:$0xff]
    %v53 = vld [vmem:[%s1 + $0xa8] sm:$0xff]
    %v54 = vld [vmem:[%s1 + $0xb0] sm:$0xff]
    %v55 = vld [vmem:[%s1 + $0xb8] sm:$0xff]
    %v56 = vld [vmem:[%s1 + $0xc0] sm:$0xff]
    %v57 = vld [vmem:[%s1 + $0xc8] sm:$0xff]
    %v58 = vld [vmem:[%s1 + $0xd0] sm:$0xff]
    %v59 = vld [vmem:[%s1 + $0xd8] sm:$0xff]
    %v60 = vld [vmem:[%s1 + $0xe0] sm:$0xff]
    %v61 = vld [vmem:[%s1 + $0xe8] sm:$0xff]
    %v62 = vld [vmem:[%s1 + $0xf0] sm:$0xff]
    %v63 = vld [vmem:[%s1 + $0xf8] sm:$0xff]
    %v64 = vld [vmem:[%s1 + $0x100] sm:$0xff]
    %v65 = vld [vmem:[%s1 + $0x108] sm:$0xff]
    %v66 = vld [vmem:[%s1 + $0x110] sm:$0xff]
    %v67 = vld [vmem:[%s1 + $0x118] sm:$0xff]
    %v68 = vld [vmem:[%s1 + $0x120] sm:$0xff]
    %v69 = vld [vmem:[%s1 + $0x128] sm:$0xff]
    %v70 = vld [vmem:[%s1 + $0x130] sm:$0xff]
    %v71 = vld [vmem:[%s1 + $0x138] sm:$0xff]
    %v72 = vld [vmem:[%s1 + $0x140] sm:$0xff]
    %v73 = vld [vmem:[%s1 + $0x148] sm:$0xff]
    %v74 = vld [vmem:[%s1 + $0x150] sm:$0xff]
    %v75 = vld [vmem:[%s1 + $0x158] sm:$0xff]
    %v76 = vld [vmem:[%s1 + $0x160] sm:$0xff]
    %v77 = vld [vmem:[%s1 + $0x168] sm:$0xff]
    %v78 = vld [vmem:[%s1 + $0x170] sm:$0xff]
    %v79 = vld [vmem:[%s1 + $0x178] sm:$0xff]
    %v80 = vld [vmem:[%s1 + $0x180] sm:$0xff]
    %v81 = vld [vmem:[%s1 + $0x188] sm:$0xf]
    %s82 = sld [smem:[#allocation2]]
    %v83 = vstv %s82
    %vm84 = vcmask 97280
    %v86 = vsel %vm84, %v31, 0
    %vm88 = vcmask 1043456
    %v90 = vsel %vm88, %v81, 0
    %92 = vmatprep.subr.mxu0 0.0
    %93 = vmatpush1.msra.mxu0 %v47
    %94 = vmatprep.subr.mxu0 0.0
    %95 = vmatpush1.msra.mxu0 %v46
    %96 = vmatprep.subr.mxu0 0.0
    %97 = vmatpush1.msra.mxu0 %v45
    %98 = vmatprep.subr.mxu0 0.0
    %99 = vmatpush1.msra.mxu0 %v44
    %100 = vmatprep.subr.mxu0 0.0
    %101 = vmatpush1.msra.mxu0 %v43
    %102 = vmatprep.subr.mxu0 0.0
    %103 = vmatpush1.msra.mxu0 %v42
    %104 = vmatprep.subr.mxu0 0.0
    %105 = vmatpush1.msra.mxu0 %v41
    %106 = vmatprep.subr.mxu0 0.0
    %107 = vmatpush1.msra.mxu0 %v40
    %108 = vmatprep.subr.mxu0 0.0
    %109 = vmatpush1.msra.mxu0 %v39
    %110 = vmatprep.subr.mxu0 0.0
    %111 = vmatpush1.msra.mxu0 %v38
    %112 = vmatprep.subr.mxu0 0.0
    %113 = vmatpush1.msra.mxu0 %v37
    %114 = vmatprep.subr.mxu0 0.0
    %115 = vmatpush1.msra.mxu0 %v36
    %116 = vmatprep.subr.mxu0 0.0
    %117 = vmatpush1.msra.mxu0 %v35
    %118 = vmatprep.subr.mxu0 0.0
    %119 = vmatpush1.msra.mxu0 %v34
    %120 = vmatprep.subr.mxu0 0.0
    %121 = vmatpush1.msra.mxu0 %v33
    %122 = vmatprep.subr.mxu0 0.0
    %123 = vmatpush1.msra.mxu0 %v32
    %124 = vmatprep.subr.mxu0 0.0
    %125 = vmatpush2.msra.mxu0 %v63
    %126 = vmatprep.subr.mxu0 0.0
    %127 = vmatpush2.msra.mxu0 %v62
    %128 = vmatprep.subr.mxu0 0.0
    %129 = vmatpush2.msra.mxu0 %v61
    %130 = vmatprep.subr.mxu0 0.0
    %131 = vmatpush2.msra.mxu0 %v60
    %132 = vmatprep.subr.mxu0 0.0
    %133 = vmatpush2.msra.mxu0 %v59
    %134 = vmatprep.subr.mxu0 0.0
    %135 = vmatpush2.msra.mxu0 %v58
    %136 = vmatprep.subr.mxu0 0.0
    %137 = vmatpush2.msra.mxu0 %v57
    %138 = vmatprep.subr.mxu0 0.0
    %139 = vmatpush2.msra.mxu0 %v56
    %140 = vmatprep.subr.mxu0 0.0
    %141 = vmatpush2.msra.mxu0 %v55
    %142 = vmatprep.subr.mxu0 0.0
    %143 = vmatpush2.msra.mxu0 %v54
    %144 = vmatprep.subr.mxu0 0.0
    %145 = vmatpush2.msra.mxu0 %v53
    %146 = vmatprep.subr.mxu0 0.0
    %147 = vmatpush2.msra.mxu0 %v52
    %148 = vmatprep.subr.mxu0 0.0
    %149 = vmatpush2.msra.mxu0 %v51
    %150 = vmatprep.subr.mxu0 0.0
    %151 = vmatpush2.msra.mxu0 %v50
    %152 = vmatprep.subr.mxu0 0.0
    %153 = vmatpush2.msra.mxu0 %v49
    %154 = vmatprep.subr.mxu0 0.0
    %155 = vmatpush2.msra.mxu0 %v48
    %156 = vmatprep.mubr.f32.mxu0 %v29
    %157 = vmatmul.mubr.f32.gmra.mxu0 %v28
    %v158 = vpop.f32.mrf.mxu0
    %v159 = vadd.f32 %v83, %v158
    %v160 = vpop.f32.mrf.mxu0
    %161 = vdwg.mxu0
    %162 = vmatprep.subr.mxu0 0.0
    %163 = vmatpush1.msra.mxu0 %v79
    %164 = vmatprep.subr.mxu0 0.0
    %165 = vmatpush1.msra.mxu0 %v78
    %166 = vmatprep.subr.mxu0 0.0
    %167 = vmatpush1.msra.mxu0 %v77
    %168 = vmatprep.subr.mxu0 0.0
    %169 = vmatpush1.msra.mxu0 %v76
    %170 = vmatprep.subr.mxu0 0.0
    %171 = vmatpush1.msra.mxu0 %v75
    %172 = vmatprep.subr.mxu0 0.0
    %173 = vmatpush1.msra.mxu0 %v74
    %174 = vmatprep.subr.mxu0 0.0
    %175 = vmatpush1.msra.mxu0 %v73
    %176 = vmatprep.subr.mxu0 0.0
    %177 = vmatpush1.msra.mxu0 %v72
    %178 = vmatprep.subr.mxu0 0.0
    %179 = vmatpush1.msra.mxu0 %v71
    %180 = vmatprep.subr.mxu0 0.0
    %181 = vmatpush1.msra.mxu0 %v70
    %182 = vmatprep.subr.mxu0 0.0
    %183 = vmatpush1.msra.mxu0 %v69
    %184 = vmatprep.subr.mxu0 0.0
    %185 = vmatpush1.msra.mxu0 %v68
    %186 = vmatprep.subr.mxu0 0.0
    %187 = vmatpush1.msra.mxu0 %v67
    %188 = vmatprep.subr.mxu0 0.0
    %189 = vmatpush1.msra.mxu0 %v66
    %190 = vmatprep.subr.mxu0 0.0
    %191 = vmatpush1.msra.mxu0 %v65
    %192 = vmatprep.subr.mxu0 0.0
    %193 = vmatpush1.msra.mxu0 %v64
    %194 = vmatprep.subr.mxu0 0.0
    %195 = vmatpush2.msra.mxu0 0.0
    %196 = vmatprep.subr.mxu0 0.0
    %197 = vmatpush2.msra.mxu0 0.0
    %198 = vmatprep.subr.mxu0 0.0
    %199 = vmatpush2.msra.mxu0 0.0
    %200 = vmatprep.subr.mxu0 0.0
    %201 = vmatpush2.msra.mxu0 0.0
    %202 = vmatprep.subr.mxu0 0.0
    %203 = vmatpush2.msra.mxu0 0.0
    %204 = vmatprep.subr.mxu0 0.0
    %205 = vmatpush2.msra.mxu0 0.0
    %206 = vmatprep.subr.mxu0 0.0
    %207 = vmatpush2.msra.mxu0 0.0
    %208 = vmatprep.subr.mxu0 0.0
    %209 = vmatpush2.msra.mxu0 0.0
    %210 = vmatprep.subr.mxu0 0.0
    %211 = vmatpush2.msra.mxu0 0.0
    %212 = vmatprep.subr.mxu0 0.0
    %213 = vmatpush2.msra.mxu0 0.0
    %214 = vmatprep.subr.mxu0 0.0
    %215 = vmatpush2.msra.mxu0 0.0
    %216 = vmatprep.subr.mxu0 0.0
    %217 = vmatpush2.msra.mxu0 0.0
    %218 = vmatprep.subr.mxu0 0.0
    %219 = vmatpush2.msra.mxu0 0.0
    %220 = vmatprep.subr.mxu0 0.0
    %221 = vmatpush2.msra.mxu0 0.0
    %222 = vmatprep.subr.mxu0 0.0
    %223 = vmatpush2.msra.mxu0 %v90
    %224 = vmatprep.subr.mxu0 0.0
    %225 = vmatpush2.msra.mxu0 %v80
    %226 = vmatprep.mubr.f32.mxu0 %v86
    %227 = vmatmul.mubr.f32.gmra.mxu0 %v30
    %v228 = vpop.f32.mrf.mxu0
    %v229 = vadd.f32 %v159, %v228
    %v230 = vpop.f32.mrf.mxu0
    %231 = vdwg.mxu0
    %v232 = vmax.f32 %v229, 0.0
    %234 = vrot.lane.b32.xlu0 %v232, 98
    %v235 = vpop.permute.xlu0 %234
    %v237 = vmax.f32 %v232, %v235
    %238 = vrot.lane.b32.xlu0 %v232, 68
    %v239 = vpop.permute.xlu0 %238
    %v241 = vmax.f32 %v237, %v239
    %v242 = vld [vmem:[%s3] sm:$0xff]
    %v243 = vld [vmem:[%s3 + $0x8] sm:$0xff]
    %v244 = vld [vmem:[%s3 + $0x10] sm:$0xff]
    %v245 = vld [vmem:[%s3 + $0x18] sm:$0xff]
    %v246 = vld [vmem:[%s3 + $0x20] sm:$0xff]
    %v247 = vld [vmem:[%s3 + $0x28] sm:$0xff]
    %v248 = vld [vmem:[%s3 + $0x30] sm:$0xff]
    %v249 = vld [vmem:[%s3 + $0x38] sm:$0xff]
    %v250 = vld [vmem:[%s3 + $0x40] sm:$0xff]
    %v251 = vld [vmem:[%s3 + $0x48] sm:$0x3f]
    %v252 = vld [vmem:[%s3 + $0x50] sm:$0x3f]
    %v253 = vld [vmem:[%s3 + $0x58] sm:$0x3f]
    %v254 = vld [vmem:[%s4] sm:$0x7]
    %v256 = vlaneseq
    %v257 = vshrl.u32 %v256, 7
    %v258 = vsub.s32 0, %v257
    %v259 = vrot.slane %v254, %v258
    %v260 = vlaneseq
    %v261 = vshrl.u32 %v260, 7
    %v262 = vsub.s32 1, %v261
    %v263 = vrot.slane %v254, %v262
    %v264 = vlaneseq
    %v265 = vshrl.u32 %v264, 7
    %v266 = vsub.s32 2, %v265
    %v267 = vrot.slane %v254, %v266
    %vm271 = vcmask 244736
    %v273 = vsel %vm271, %v241, 0
    %vm275 = vcmask 1045504
    %v277 = vsel %vm275, %v251, 0
    %v280 = vsel %vm275, %v252, 0
    %v283 = vsel %vm275, %v253, 0
    %285 = vmatprep.subr.mxu0 0.0
    %286 = vmatpush1.msra.mxu0 0.0
    %287 = vmatprep.subr.mxu0 0.0
    %288 = vmatpush1.msra.mxu0 0.0
    %289 = vmatprep.subr.mxu0 0.0
    %290 = vmatpush1.msra.mxu0 0.0
    %291 = vmatprep.subr.mxu0 0.0
    %292 = vmatpush1.msra.mxu0 0.0
    %293 = vmatprep.subr.mxu0 0.0
    %294 = vmatpush1.msra.mxu0 0.0
    %295 = vmatprep.subr.mxu0 0.0
    %296 = vmatpush1.msra.mxu0 0.0
    %297 = vmatprep.subr.mxu0 0.0
    %298 = vmatpush1.msra.mxu0 0.0
    %299 = vmatprep.subr.mxu0 0.0
    %300 = vmatpush1.msra.mxu0 0.0
    %301 = vmatprep.subr.mxu0 0.0
    %302 = vmatpush1.msra.mxu0 0.0
    %303 = vmatprep.subr.mxu0 0.0
    %304 = vmatpush1.msra.mxu0 0.0
    %305 = vmatprep.subr.mxu0 0.0
    %306 = vmatpush1.msra.mxu0 0.0
    %307 = vmatprep.subr.mxu0 0.0
    %308 = vmatpush1.msra.mxu0 0.0
    %309 = vmatprep.subr.mxu0 %v280
    %310 = vmatpush1.msra.mxu0 %v277
    %311 = vmatprep.subr.mxu0 %v249
    %312 = vmatpush1.msra.mxu0 %v248
    %313 = vmatprep.subr.mxu0 %v246
    %314 = vmatpush1.msra.mxu0 %v245
    %315 = vmatprep.subr.mxu0 %v243
    %316 = vmatpush1.msra.mxu0 %v242
    %317 = vmatprep.subr.mxu0 0.0
    %318 = vmatpush2.msra.mxu0 0.0
    %319 = vmatprep.subr.mxu0 0.0
    %320 = vmatpush2.msra.mxu0 0.0
    %321 = vmatprep.subr.mxu0 0.0
    %322 = vmatpush2.msra.mxu0 0.0
    %323 = vmatprep.subr.mxu0 0.0
    %324 = vmatpush2.msra.mxu0 0.0
    %325 = vmatprep.subr.mxu0 0.0
    %326 = vmatpush2.msra.mxu0 0.0
    %327 = vmatprep.subr.mxu0 0.0
    %328 = vmatpush2.msra.mxu0 0.0
    %329 = vmatprep.subr.mxu0 0.0
    %330 = vmatpush2.msra.mxu0 0.0
    %331 = vmatprep.subr.mxu0 0.0
    %332 = vmatpush2.msra.mxu0 0.0
    %333 = vmatprep.subr.mxu0 0.0
    %334 = vmatpush2.msra.mxu0 0.0
    %335 = vmatprep.subr.mxu0 0.0
    %336 = vmatpush2.msra.mxu0 0.0
    %337 = vmatprep.subr.mxu0 0.0
    %338 = vmatpush2.msra.mxu0 0.0
    %339 = vmatprep.subr.mxu0 0.0
    %340 = vmatpush2.msra.mxu0 0.0
    %341 = vmatprep.subr.mxu0 0.0
    %342 = vmatpush2.msra.mxu0 0.0
    %343 = vmatprep.subr.mxu0 0.0
    %344 = vmatpush2.msra.mxu0 0.0
    %345 = vmatprep.subr.mxu0 0.0
    %346 = vmatpush2.msra.mxu0 0.0
    %347 = vmatprep.subr.mxu0 0.0
    %348 = vmatpush2.msra.mxu0 0.0
    %349 = vmatprep.mubr.f32.mxu0 0.0
    %350 = vmatmul.mubr.f32.gmra.mxu0 %v273
    %v351 = vpop.f32.mrf.mxu0
    %v352 = vadd.f32 %v259, %v351
    %v353 = vpop.f32.mrf.mxu0
    %v354 = vadd.f32 %v263, %v353
    %355 = vdwg.mxu0
    %356 = vmatprep.subr.mxu0 0.0
    %357 = vmatpush1.msra.mxu0 0.0
    %358 = vmatprep.subr.mxu0 0.0
    %359 = vmatpush1.msra.mxu0 0.0
    %360 = vmatprep.subr.mxu0 0.0
    %361 = vmatpush1.msra.mxu0 0.0
    %362 = vmatprep.subr.mxu0 0.0
    %363 = vmatpush1.msra.mxu0 0.0
    %364 = vmatprep.subr.mxu0 0.0
    %365 = vmatpush1.msra.mxu0 0.0
    %366 = vmatprep.subr.mxu0 0.0
    %367 = vmatpush1.msra.mxu0 0.0
    %368 = vmatprep.subr.mxu0 0.0
    %369 = vmatpush1.msra.mxu0 0.0
    %370 = vmatprep.subr.mxu0 0.0
    %371 = vmatpush1.msra.mxu0 0.0
    %372 = vmatprep.subr.mxu0 0.0
    %373 = vmatpush1.msra.mxu0 0.0
    %374 = vmatprep.subr.mxu0 0.0
    %375 = vmatpush1.msra.mxu0 0.0
    %376 = vmatprep.subr.mxu0 0.0
    %377 = vmatpush1.msra.mxu0 0.0
    %378 = vmatprep.subr.mxu0 0.0
    %379 = vmatpush1.msra.mxu0 0.0
    %380 = vmatprep.subr.mxu0 0.0
    %381 = vmatpush1.msra.mxu0 %v283
    %382 = vmatprep.subr.mxu0 0.0
    %383 = vmatpush1.msra.mxu0 %v250
    %384 = vmatprep.subr.mxu0 0.0
    %385 = vmatpush1.msra.mxu0 %v247
    %386 = vmatprep.subr.mxu0 0.0
    %387 = vmatpush1.msra.mxu0 %v244
    %388 = vmatprep.subr.mxu0 0.0
    %389 = vmatpush2.msra.mxu0 0.0
    %390 = vmatprep.subr.mxu0 0.0
    %391 = vmatpush2.msra.mxu0 0.0
    %392 = vmatprep.subr.mxu0 0.0
    %393 = vmatpush2.msra.mxu0 0.0
    %394 = vmatprep.subr.mxu0 0.0
    %395 = vmatpush2.msra.mxu0 0.0
    %396 = vmatprep.subr.mxu0 0.0
    %397 = vmatpush2.msra.mxu0 0.0
    %398 = vmatprep.subr.mxu0 0.0
    %399 = vmatpush2.msra.mxu0 0.0
    %400 = vmatprep.subr.mxu0 0.0
    %401 = vmatpush2.msra.mxu0 0.0
    %402 = vmatprep.subr.mxu0 0.0
    %403 = vmatpush2.msra.mxu0 0.0
    %404 = vmatprep.subr.mxu0 0.0
    %405 = vmatpush2.msra.mxu0 0.0
    %406 = vmatprep.subr.mxu0 0.0
    %407 = vmatpush2.msra.mxu0 0.0
    %408 = vmatprep.subr.mxu0 0.0
    %409 = vmatpush2.msra.mxu0 0.0
    %410 = vmatprep.subr.mxu0 0.0
    %411 = vmatpush2.msra.mxu0 0.0
    %412 = vmatprep.subr.mxu0 0.0
    %413 = vmatpush2.msra.mxu0 0.0
    %414 = vmatprep.subr.mxu0 0.0
    %415 = vmatpush2.msra.mxu0 0.0
    %416 = vmatprep.subr.mxu0 0.0
    %417 = vmatpush2.msra.mxu0 0.0
    %418 = vmatprep.subr.mxu0 0.0
    %419 = vmatpush2.msra.mxu0 0.0
    %420 = vmatprep.mubr.f32.mxu0 0.0
    %421 = vmatmul.mubr.f32.gmra.mxu0 %v273
    %v422 = vpop.f32.mrf.mxu0
    %v423 = vadd.f32 %v267, %v422
    %v424 = vpop.f32.mrf.mxu0
    %425 = vdwg.mxu0
    %v426 = vxor.u32 %v352, 2147483648
    %v427 = vmul.f32 %v426, 1.442695
    %v428 = vpow.pop %v427
    %v429 = vadd.f32 %v428, 1.0
    %v430 = vrcp.pop %v429
    %v431 = vmul.f32 1.0, %v430
    %v432 = vtanh.pop %v354
    %v433 = vxor.u32 %v423, 2147483648
    %v434 = vmul.f32 %v433, 1.442695
    %v435 = vpow.pop %v434
    %v436 = vadd.f32 %v435, 1.0
    %v437 = vrcp.pop %v436
    %v438 = vmul.f32 1.0, %v437
    %v439 = vmul.f32 %v431, %v432
    %v440 = vtanh.pop %v439
    %v441 = vmul.f32 %v438, %v440
    %v442 = vld [vmem:[%s5] sm:$0xff]
    %v443 = vld [vmem:[%s5 + $0x8] sm:$0xff]
    %v444 = vld [vmem:[%s5 + $0x10] sm:$0xff]
    %v445 = vld [vmem:[%s5 + $0x18] sm:$0xff]
    %v446 = vld [vmem:[%s5 + $0x20] sm:$0xff]
    %v447 = vld [vmem:[%s5 + $0x28] sm:$0xff]
    %v448 = vld [vmem:[%s5 + $0x30] sm:$0xff]
    %v449 = vld [vmem:[%s5 + $0x38] sm:$0xff]
    %v450 = vld [vmem:[%s5 + $0x40] sm:$0xff]
    %v451 = vld [vmem:[%s5 + $0x48] sm:$0xff]
    %v452 = vld [vmem:[%s5 + $0x50] sm:$0xff]
    %v453 = vld [vmem:[%s5 + $0x58] sm:$0xff]
    %v454 = vld [vmem:[%s5 + $0x60] sm:$0xff]
    %v455 = vld [vmem:[%s5 + $0x68] sm:$0xff]
    %v456 = vld [vmem:[%s5 + $0x70] sm:$0xff]
    %v457 = vld [vmem:[%s5 + $0x78] sm:$0xff]
    %v458 = vld [vmem:[%s6] sm:$0x1]
    %v460 = vlaneseq
    %v461 = vshrl.u32 %v460, 7
    %v462 = vsub.s32 0, %v461
    %v463 = vrot.slane %v458, %v462
    %465 = vmatprep.subr.mxu0 0.0
    %466 = vmatpush1.msra.mxu0 %v457
    %467 = vmatprep.subr.mxu0 0.0
    %468 = vmatpush1.msra.mxu0 %v456
    %469 = vmatprep.subr.mxu0 0.0
    %470 = vmatpush1.msra.mxu0 %v455
    %471 = vmatprep.subr.mxu0 0.0
    %472 = vmatpush1.msra.mxu0 %v454
    %473 = vmatprep.subr.mxu0 0.0
    %474 = vmatpush1.msra.mxu0 %v453
    %475 = vmatprep.subr.mxu0 0.0
    %476 = vmatpush1.msra.mxu0 %v452
    %477 = vmatprep.subr.mxu0 0.0
    %478 = vmatpush1.msra.mxu0 %v451
    %479 = vmatprep.subr.mxu0 0.0
    %480 = vmatpush1.msra.mxu0 %v450
    %481 = vmatprep.subr.mxu0 0.0
    %482 = vmatpush1.msra.mxu0 %v449
    %483 = vmatprep.subr.mxu0 0.0
    %484 = vmatpush1.msra.mxu0 %v448
    %485 = vmatprep.subr.mxu0 0.0
    %486 = vmatpush1.msra.mxu0 %v447
    %487 = vmatprep.subr.mxu0 0.0
    %488 = vmatpush1.msra.mxu0 %v446
    %489 = vmatprep.subr.mxu0 0.0
    %490 = vmatpush1.msra.mxu0 %v445
    %491 = vmatprep.subr.mxu0 0.0
    %492 = vmatpush1.msra.mxu0 %v444
    %493 = vmatprep.subr.mxu0 0.0
    %494 = vmatpush1.msra.mxu0 %v443
    %495 = vmatprep.subr.mxu0 0.0
    %496 = vmatpush1.msra.mxu0 %v442
    %497 = vmatprep.subr.mxu0 0.0
    %498 = vmatpush2.msra.mxu0 0.0
    %499 = vmatprep.subr.mxu0 0.0
    %500 = vmatpush2.msra.mxu0 0.0
    %501 = vmatprep.subr.mxu0 0.0
    %502 = vmatpush2.msra.mxu0 0.0
    %503 = vmatprep.subr.mxu0 0.0
    %504 = vmatpush2.msra.mxu0 0.0
    %505 = vmatprep.subr.mxu0 0.0
    %506 = vmatpush2.msra.mxu0 0.0
    %507 = vmatprep.subr.mxu0 0.0
    %508 = vmatpush2.msra.mxu0 0.0
    %509 = vmatprep.subr.mxu0 0.0
    %510 = vmatpush2.msra.mxu0 0.0
    %511 = vmatprep.subr.mxu0 0.0
    %512 = vmatpush2.msra.mxu0 0.0
    %513 = vmatprep.subr.mxu0 0.0
    %514 = vmatpush2.msra.mxu0 0.0
    %515 = vmatprep.subr.mxu0 0.0
    %516 = vmatpush2.msra.mxu0 0.0
    %517 = vmatprep.subr.mxu0 0.0
    %518 = vmatpush2.msra.mxu0 0.0
    %519 = vmatprep.subr.mxu0 0.0
    %520 = vmatpush2.msra.mxu0 0.0
    %521 = vmatprep.subr.mxu0 0.0
    %522 = vmatpush2.msra.mxu0 0.0
    %523 = vmatprep.subr.mxu0 0.0
    %524 = vmatpush2.msra.mxu0 0.0
    %525 = vmatprep.subr.mxu0 0.0
    %526 = vmatpush2.msra.mxu0 0.0
    %527 = vmatprep.subr.mxu0 0.0
    %528 = vmatpush2.msra.mxu0 0.0
    %529 = vmatprep.mubr.f32.mxu0 0.0
    %530 = vmatmul.mubr.f32.gmra.mxu0 %v441
    %v531 = vpop.f32.mrf.mxu0
    %v532 = vadd.f32 %v463, %v531
    %v533 = vpop.f32.mrf.mxu0
    %534 = vdwg.mxu0
    %v535 = vxor.u32 %v532, 2147483648
    %v536 = vmul.f32 %v535, 1.442695
    %v537 = vpow.pop %v536
    %v538 = vadd.f32 %v537, 1.0
    %v539 = vrcp.pop %v538
    %v540 = vmul.f32 1.0, %v539
    %541 = vst [vmem:[#allocation3] sm:$0xff] %v540
    // Predicated region
    $region30: #{tpu_custom_call.1} parent=1 // pred_check
      _
    $region31: #{tpu_custom_call.1} parent=1 // pred_check_branch
      %543 = sbr.rel (0) target = $region33
    $region32: #{tpu_custom_call.1} parent=1 // pred_region
      %s545 = ssub.s32 128, 128
      %546 = vsyncadd [#allocation4], %s545
      %s548 = sshll.u32 [#allocation3], 4
      %s549 = int_to_ptr.vmem [resolvable:$true] %s548
      %551 = dma.vmem_to_hbm [thread:$0]  %s549, 128, %s7, [#allocation4]
    $region33: #{tpu_custom_call.1} parent=1 // pred_fallthru
      _
    // Predicated region
    $region34: #{tpu_custom_call.1} parent=1 // pred_check
      _
    $region35: #{tpu_custom_call.1} parent=1 // pred_check_branch
      %553 = sbr.rel (0) target = $region37
    $region36: #{tpu_custom_call.1} parent=1 // pred_region
      %554 = dma.done [#allocation4], 128
    $region37: #{tpu_custom_call.1} parent=1 // pred_fallthru
      _
    %555 = vsyncpa [#allocation4], 1

</llo_original>
